<compile_context>
chip_gen: v5e
topology: v5e:2x2
jax: 0.10.0
libtpu: 0.0.40
codegen_flags: <defaults>
</compile_context>

<pallas_src>
import functools

import jax
import jax.numpy as jnp
from jax.experimental import pallas as pl
from jax.experimental.pallas import tpu as pltpu

_LANE = 128          # vreg lane width
_SUBLANE = 8         # vreg sublane count (f32)
_MAX_BATCH_TILE = 512


def _round_up(n, m):
    return ((n + m - 1) // m) * m


def _make_mlp_kernel(num_layers):
    """Fused MLP kernel.

    Signature: (x_ref, w0_ref, b0_ref, ..., w{L-1}_ref, b{L-1}_ref, out_ref)
    x_ref:  (TB, K0_pad) f32 activation tile for this grid step.
    wi_ref: (Ki_pad, Ni_pad), bi_ref: (1, Ni_pad) — resident across grid steps.
    """

    def kernel(*refs):
        x_ref = refs[0]
        out_ref = refs[-1]
        param_refs = refs[1:-1]

        h = x_ref[...]
        if h.dtype != jnp.float32:
            h = h.astype(jnp.float32)

        for i in range(num_layers):
            w = param_refs[2 * i][...]        # (Kpad, Npad)
            b = param_refs[2 * i + 1][...]    # (1, Npad)
            lhs = h if w.dtype == jnp.float32 else h.astype(w.dtype)
            h = jnp.dot(lhs, w, preferred_element_type=jnp.float32)
            h = h + (b if b.dtype == jnp.float32 else b.astype(jnp.float32))
            if i < num_layers - 1:            # ReLU on hidden layers (f32 VPU)
                h = jnp.maximum(h, 0.0)

        out_ref[...] = h.astype(out_ref.dtype)

    return kernel


def prepare_params(params, param_dtype=jnp.float32):
    """One-time param reformat: pad each layer to lane-dense widths and cast.

    params: list of (W, b) with W of shape (in, out), b of shape (out,).
    Returns (flat_params tuple suitable for qnetwork_forward, out_dim).
    Zero padding keeps the math exact: padded columns stay identically zero
    through ReLU and contribute nothing downstream.
    """
    flat = []
    for w, b in params:
        k, n = w.shape
        kp, np_ = _round_up(k, _LANE), _round_up(n, _LANE)
        wp = jnp.zeros((kp, np_), param_dtype).at[:k, :n].set(w.astype(param_dtype))
        bp = jnp.zeros((1, np_), param_dtype).at[0, :n].set(b.astype(param_dtype))
        flat.append(wp)
        flat.append(bp)
    return tuple(flat), params[-1][0].shape[1]


@functools.partial(jax.jit, static_argnums=(2,))
def qnetwork_forward(x, flat_params, out_dim):
    """Forward pass of QNetwork.

    x:           any shape (batch, ...) — flattened to (batch, -1) like PyTorch.
    flat_params: tuple from prepare_params (padded W0, b0, W1, b1, ...).
    out_dim:     true number of actions (static).
    Returns (batch, out_dim) float32.
    """
    batch = x.shape[0]
    x2d = jnp.reshape(x, (batch, -1))
    if x2d.dtype != jnp.float32:
        x2d = x2d.astype(jnp.float32)

    in_features = x2d.shape[1]
    in_pad = flat_params[0].shape[0]      # padded K of first layer
    out_pad = flat_params[-1].shape[1]    # padded N of last layer
    num_layers = len(flat_params) // 2

    # Adaptive batch tile: multiple of the sublane, large enough to fill MXU rows
    # for real batches, tiny for toy batches, capped so VMEM stays small on v7x.
    tb = min(_MAX_BATCH_TILE, _round_up(batch, _SUBLANE))
    batch_pad = _round_up(batch, tb)

    # Zero-pad features to the lane-dense width and batch to a tile multiple.
    xp = jnp.zeros((batch_pad, in_pad), jnp.float32)
    xp = xp.at[:batch, :in_features].set(x2d)

    grid = (batch_pad // tb,)

    x_spec = pl.BlockSpec((tb, in_pad), lambda i: (i, 0))
    param_specs = [pl.BlockSpec(p.shape, lambda i: (0, 0)) for p in flat_params]
    out_spec = pl.BlockSpec((tb, out_pad), lambda i: (i, 0))

    out_padded = pl.pallas_call(
        _make_mlp_kernel(num_layers),
        out_shape=jax.ShapeDtypeStruct((batch_pad, out_pad), jnp.float32),
        grid=grid,
        in_specs=[x_spec] + param_specs,
        out_specs=out_spec,
        compiler_params=pltpu.CompilerParams(
            dimension_semantics=("parallel",),   # shard batch tiles across TCs on v7x
        ),
    )(xp, *flat_params)

    return out_padded[:batch, :out_dim]


def init_qnetwork_params(key, fc_layers):
    """Deterministic init matching nn.Linear shapes.

    PyTorch nn.Linear(i, o): weight (o, i), bias (o,), U(-1/sqrt(i), 1/sqrt(i)).
    Stored pre-transposed as (i, o) for the kernel.
    """
    params = []
    for i in range(1, len(fc_layers)):
        fan_in, fan_out = fc_layers[i - 1], fc_layers[i]
        key, kw, kb = jax.random.split(key, 3)
        bound = 1.0 / jnp.sqrt(jnp.float32(fan_in))
        w = jax.random.uniform(kw, (fan_in, fan_out), jnp.float32, -bound, bound)
        b = jax.random.uniform(kb, (fan_out,), jnp.float32, -bound, bound)
        params.append((w, b))
    return params


def qnetwork_forward_ref(x, params):
    """Pure-JAX reference for validation."""
    h = jnp.reshape(x, (x.shape[0], -1)).astype(jnp.float32)
    for i, (w, b) in enumerate(params):
        h = h @ w + b
        if i < len(params) - 1:
            h = jnp.maximum(h, 0.0)
    return h


if __name__ == "__main__":
    key = jax.random.PRNGKey(0)
    key, kx, kp = jax.random.split(key, 3)

    # fc_layers = [in_features, hidden1, hidden2, num_actions]
    fc_layers = [64, 32, 32, 8]
    batch = 2

    # Input matches the flattened feature count: (2, 4, 4, 4) -> view -> (2, 64)
    x = jax.random.normal(kx, (batch, 4, 4, 4), jnp.float32)
    params = init_qnetwork_params(kp, fc_layers)

    # One-time param preparation (padding + cast) hoisted out of the forward.
    flat_params, out_dim = prepare_params(params, param_dtype=jnp.float32)

    out = qnetwork_forward(x, flat_params, out_dim)
    out = jax.block_until_ready(out)

    ref = qnetwork_forward_ref(x, params)
    assert out.shape == (batch, fc_layers[-1])
    assert jnp.allclose(out, ref, atol=1e-5, rtol=1e-5), "mismatch vs reference"

    print("KERNEL_OK")
</pallas_src>

<mosaic_0001>
module attributes {stable_mosaic.version = 11 : i64} {
  func.func @kernel(%arg0: i32, %arg1: memref<8x128xf32, #tpu.memory_space<vmem>>, %arg2: memref<128x128xf32, #tpu.memory_space<vmem>>, %arg3: memref<1x128xf32, #tpu.memory_space<vmem>>, %arg4: memref<128x128xf32, #tpu.memory_space<vmem>>, %arg5: memref<1x128xf32, #tpu.memory_space<vmem>>, %arg6: memref<128x128xf32, #tpu.memory_space<vmem>>, %arg7: memref<1x128xf32, #tpu.memory_space<vmem>>, %arg8: memref<8x128xf32, #tpu.memory_space<vmem>>) attributes {dimension_semantics = [#tpu.dimension_semantics<parallel>], iteration_bounds = array<i64: 1>, scalar_prefetch = 0 : i64, scratch_operands = 0 : i64, tpu.core_type = #tpu.core_type<tc>, window_params = [{transform_indices = @transform_0, window_bounds = array<i64: 8, 128>}, {pipeline_mode = #tpu.pipeline_mode<synchronous>, transform_indices = @transform_1, window_bounds = array<i64: 128, 128>}, {pipeline_mode = #tpu.pipeline_mode<synchronous>, transform_indices = @transform_2, window_bounds = array<i64: 1, 128>}, {pipeline_mode = #tpu.pipeline_mode<synchronous>, transform_indices = @transform_3, window_bounds = array<i64: 128, 128>}, {pipeline_mode = #tpu.pipeline_mode<synchronous>, transform_indices = @transform_4, window_bounds = array<i64: 1, 128>}, {pipeline_mode = #tpu.pipeline_mode<synchronous>, transform_indices = @transform_5, window_bounds = array<i64: 128, 128>}, {pipeline_mode = #tpu.pipeline_mode<synchronous>, transform_indices = @transform_6, window_bounds = array<i64: 1, 128>}, {transform_indices = @transform_7, window_bounds = array<i64: 8, 128>}]} {
    %c0 = arith.constant 0 : index
    %c0_0 = arith.constant 0 : index
    %0 = vector.load %arg1[%c0, %c0_0] : memref<8x128xf32, #tpu.memory_space<vmem>>, vector<8x128xf32>
    %c0_1 = arith.constant 0 : index
    %c0_2 = arith.constant 0 : index
    %1 = vector.load %arg2[%c0_1, %c0_2] : memref<128x128xf32, #tpu.memory_space<vmem>>, vector<128x128xf32>
    %c0_3 = arith.constant 0 : index
    %c0_4 = arith.constant 0 : index
    %2 = vector.load %arg3[%c0_3, %c0_4] : memref<1x128xf32, #tpu.memory_space<vmem>>, vector<1x128xf32>
    %cst = arith.constant dense<0.000000e+00> : vector<8x128xf32>
    %3 = tpu.matmul %0, %1, %cst {dimension_numbers = #tpu.dot_dimension_numbers<[1], [0], [0], [1], [0, 0, 1, 1], [], []>} : vector<8x128xf32>, vector<128x128xf32>, vector<8x128xf32> -> vector<8x128xf32>
    %4 = vector.broadcast %2 : vector<1x128xf32> to vector<8x128xf32>
    %5 = arith.addf %3, %4 : vector<8x128xf32>
    %cst_5 = arith.constant 0.000000e+00 : f32
    %6 = vector.broadcast %cst_5 : f32 to vector<8x128xf32>
    %7 = arith.maximumf %5, %6 : vector<8x128xf32>
    %c0_6 = arith.constant 0 : index
    %c0_7 = arith.constant 0 : index
    %8 = vector.load %arg4[%c0_6, %c0_7] : memref<128x128xf32, #tpu.memory_space<vmem>>, vector<128x128xf32>
    %c0_8 = arith.constant 0 : index
    %c0_9 = arith.constant 0 : index
    %9 = vector.load %arg5[%c0_8, %c0_9] : memref<1x128xf32, #tpu.memory_space<vmem>>, vector<1x128xf32>
    %cst_10 = arith.constant dense<0.000000e+00> : vector<8x128xf32>
    %10 = tpu.matmul %7, %8, %cst_10 {dimension_numbers = #tpu.dot_dimension_numbers<[1], [0], [0], [1], [0, 0, 1, 1], [], []>} : vector<8x128xf32>, vector<128x128xf32>, vector<8x128xf32> -> vector<8x128xf32>
    %11 = vector.broadcast %9 : vector<1x128xf32> to vector<8x128xf32>
    %12 = arith.addf %10, %11 : vector<8x128xf32>
    %cst_11 = arith.constant 0.000000e+00 : f32
    %13 = vector.broadcast %cst_11 : f32 to vector<8x128xf32>
    %14 = arith.maximumf %12, %13 : vector<8x128xf32>
    %c0_12 = arith.constant 0 : index
    %c0_13 = arith.constant 0 : index
    %15 = vector.load %arg6[%c0_12, %c0_13] : memref<128x128xf32, #tpu.memory_space<vmem>>, vector<128x128xf32>
    %c0_14 = arith.constant 0 : index
    %c0_15 = arith.constant 0 : index
    %16 = vector.load %arg7[%c0_14, %c0_15] : memref<1x128xf32, #tpu.memory_space<vmem>>, vector<1x128xf32>
    %cst_16 = arith.constant dense<0.000000e+00> : vector<8x128xf32>
    %17 = tpu.matmul %14, %15, %cst_16 {dimension_numbers = #tpu.dot_dimension_numbers<[1], [0], [0], [1], [0, 0, 1, 1], [], []>} : vector<8x128xf32>, vector<128x128xf32>, vector<8x128xf32> -> vector<8x128xf32>
    %18 = vector.broadcast %16 : vector<1x128xf32> to vector<8x128xf32>
    %19 = arith.addf %17, %18 : vector<8x128xf32>
    %c0_17 = arith.constant 0 : index
    %c0_18 = arith.constant 0 : index
    %20 = vector.load %arg8[%c0_17, %c0_18] : memref<8x128xf32, #tpu.memory_space<vmem>>, vector<8x128xf32>
    tpu.vector_store %arg8[%c0_17, %c0_18], %19 {strides = array<i32>} : memref<8x128xf32, #tpu.memory_space<vmem>>, vector<8x128xf32>,
    return
  }
  func.func @transform_0(%arg0: i32) -> (i32, i32) {
    %c0_i32 = arith.constant 0 : i32
    %c0_i32_0 = arith.constant 0 : i32
    return %arg0, %c0_i32 : i32, i32
  }
  func.func @transform_1(%arg0: i32) -> (i32, i32) {
    %c0_i32 = arith.constant 0 : i32
    %c0_i32_0 = arith.constant 0 : i32
    %c0_i32_1 = arith.constant 0 : i32
    return %c0_i32, %c0_i32_0 : i32, i32
  }
  func.func @transform_2(%arg0: i32) -> (i32, i32) {
    %c0_i32 = arith.constant 0 : i32
    %c0_i32_0 = arith.constant 0 : i32
    %c0_i32_1 = arith.constant 0 : i32
    return %c0_i32, %c0_i32_0 : i32, i32
  }
  func.func @transform_3(%arg0: i32) -> (i32, i32) {
    %c0_i32 = arith.constant 0 : i32
    %c0_i32_0 = arith.constant 0 : i32
    %c0_i32_1 = arith.constant 0 : i32
    return %c0_i32, %c0_i32_0 : i32, i32
  }
  func.func @transform_4(%arg0: i32) -> (i32, i32) {
    %c0_i32 = arith.constant 0 : i32
    %c0_i32_0 = arith.constant 0 : i32
    %c0_i32_1 = arith.constant 0 : i32
    return %c0_i32, %c0_i32_0 : i32, i32
  }
  func.func @transform_5(%arg0: i32) -> (i32, i32) {
    %c0_i32 = arith.constant 0 : i32
    %c0_i32_0 = arith.constant 0 : i32
    %c0_i32_1 = arith.constant 0 : i32
    return %c0_i32, %c0_i32_0 : i32, i32
  }
  func.func @transform_6(%arg0: i32) -> (i32, i32) {
    %c0_i32 = arith.constant 0 : i32
    %c0_i32_0 = arith.constant 0 : i32
    %c0_i32_1 = arith.constant 0 : i32
    return %c0_i32, %c0_i32_0 : i32, i32
  }
  func.func @transform_7(%arg0: i32) -> (i32, i32) {
    %c0_i32 = arith.constant 0 : i32
    %c0_i32_0 = arith.constant 0 : i32
    return %arg0, %c0_i32 : i32, i32
  }
}

</mosaic_0001>

<llo_original>
// kernel: qnetwork_forward.1
$region0: #{qnetwork_forward.1}
  #allocation0 [shape = 'u32[]', space=smem, size = 0x4, offset = 0x4, fixed_abs, tag = 'smem constant byte address 0x4 - core index']
  #allocation1 [shape = 'u32[72,128]{1,0:T(1,128)}', space=vmem, size = 0x9000, scoped, tag = 'internal scratch']
  %s0 = inlined_call_operand.vmem [shape: f32[8,128], index: 0, kind: input, shape index: {}]
  %s1 = inlined_call_operand.hbm [shape: f32[128,128], index: 1, kind: input, shape index: {}]
  %s2 = inlined_call_operand.vmem [shape: f32[1,128], index: 2, kind: input, shape index: {}]
  %s3 = inlined_call_operand.hbm [shape: f32[128,128], index: 3, kind: input, shape index: {}]
  %s4 = inlined_call_operand.vmem [shape: f32[1,128], index: 4, kind: input, shape index: {}]
  %s5 = inlined_call_operand.hbm [shape: f32[128,128], index: 5, kind: input, shape index: {}]
  %s6 = inlined_call_operand.vmem [shape: f32[1,128], index: 6, kind: input, shape index: {}]
  %s7 = inlined_call_operand.vmem [shape: f32[8,128], index: 7, kind: output, shape index: {}]
  %s8 = sld [smem:[#allocation0]]
  $region50: #{qnetwork_forward.1} parent=0
    _
  %s10 = ssub.s32 1, %s8
  %s11 = scalar_select 0, %s10, %s8
  $region1: #{qnetwork_forward.1} parent=0
    #allocation2 [shape = 'u8[65536]{0}', space=vmem, size = 0x10000, scoped, tag = 'input window, operand 1, single buffered']
    #allocation3 [shape = 's32[1]{0}', space=sflag, size = 0x4, scoped, tag = 'scoped memory for qnetwork_forward.1']
    #allocation4 [shape = 'u8[65536]{0}', space=vmem, size = 0x10000, scoped, tag = 'input window, operand 3, single buffered']
    #allocation5 [shape = 's32[1]{0}', space=sflag, size = 0x4, scoped, tag = 'scoped memory for qnetwork_forward.1']
    #allocation6 [shape = 'u8[65536]{0}', space=vmem, size = 0x10000, scoped, tag = 'input window, operand 5, single buffered']
    %12 = vsyncpa [#allocation3], 0
    %13 = vsyncpa [#allocation5], 0
    // Predicated region
    $region2: #{qnetwork_forward.1} parent=1 // pred_check
      _
    $region3: #{qnetwork_forward.1} parent=1 // pred_check_branch
      %15 = sbr.rel (0) target = $region5
    $region4: #{qnetwork_forward.1} parent=1 // pred_region
      _
    $region5: #{qnetwork_forward.1} parent=1 // pred_fallthru
      _
    // Predicated region
    $region6: #{qnetwork_forward.1} parent=1 // pred_check
      _
    $region7: #{qnetwork_forward.1} parent=1 // pred_check_branch
      %17 = sbr.rel (0) target = $region9
    $region8: #{qnetwork_forward.1} parent=1 // pred_region
      %19 = vsyncadd [#allocation3], 0
      %s20 = sshll.u32 %s1, 4
      %s21 = int_to_ptr.hbm [resolvable:$true] %s20
      %s22 = sshll.u32 [#allocation2], 4
      %s23 = int_to_ptr.vmem [resolvable:$true] %s22
      %28 = dma.hbm_to_vmem [thread:$0]  %s21, 2048, %s23, [#allocation3], 128, 128, 8
    $region9: #{qnetwork_forward.1} parent=1 // pred_fallthru
      _
    // Predicated region
    $region10: #{qnetwork_forward.1} parent=1 // pred_check
      _
    $region11: #{qnetwork_forward.1} parent=1 // pred_check_branch
      %30 = sbr.rel (0) target = $region13
    $region12: #{qnetwork_forward.1} parent=1 // pred_region
      _
    $region13: #{qnetwork_forward.1} parent=1 // pred_fallthru
      _
    // Predicated region
    $region14: #{qnetwork_forward.1} parent=1 // pred_check
      _
    $region15: #{qnetwork_forward.1} parent=1 // pred_check_branch
      %32 = sbr.rel (0) target = $region17
    $region16: #{qnetwork_forward.1} parent=1 // pred_region
      %34 = vsyncadd [#allocation5], 0
      %s35 = sshll.u32 %s3, 4
      %s36 = int_to_ptr.hbm [resolvable:$true] %s35
      %s37 = sshll.u32 [#allocation4], 4
      %s38 = int_to_ptr.vmem [resolvable:$true] %s37
      %43 = dma.hbm_to_vmem [thread:$0]  %s36, 2048, %s38, [#allocation5], 128, 128, 8
    $region17: #{qnetwork_forward.1} parent=1 // pred_fallthru
      _
    // Predicated region
    $region18: #{qnetwork_forward.1} parent=1 // pred_check
      _
    $region19: #{qnetwork_forward.1} parent=1 // pred_check_branch
      %45 = sbr.rel (0) target = $region21
    $region20: #{qnetwork_forward.1} parent=1 // pred_region
      _
    $region21: #{qnetwork_forward.1} parent=1 // pred_fallthru
      _
    // Predicated region
    $region22: #{qnetwork_forward.1} parent=1 // pred_check
      _
    $region23: #{qnetwork_forward.1} parent=1 // pred_check_branch
      %47 = sbr.rel (0) target = $region25
    $region24: #{qnetwork_forward.1} parent=1 // pred_region
      %49 = vsyncadd [#allocation5], 0
      %s50 = sshll.u32 %s5, 4
      %s51 = int_to_ptr.hbm [resolvable:$true] %s50
      %s52 = sshll.u32 [#allocation6], 4
      %s53 = int_to_ptr.vmem [resolvable:$true] %s52
      %58 = dma.hbm_to_vmem [thread:$0]  %s51, 2048, %s53, [#allocation5], 128, 128, 8
    $region25: #{qnetwork_forward.1} parent=1 // pred_fallthru
      _
    // Predicated region
    $region26: #{qnetwork_forward.1} parent=1 // pred_check
      _
    $region27: #{qnetwork_forward.1} parent=1 // pred_check_branch
      %60 = sbr.rel (0) target = $region29
    $region28: #{qnetwork_forward.1} parent=1 // pred_region
      _
    $region29: #{qnetwork_forward.1} parent=1 // pred_fallthru
      _
    // Predicated region
    $region30: #{qnetwork_forward.1} parent=1 // pred_check
      _
    $region31: #{qnetwork_forward.1} parent=1 // pred_check_branch
      %62 = sbr.rel (0) target = $region33
    $region32: #{qnetwork_forward.1} parent=1 // pred_region
      %64 = dma.done [#allocation3], 2048
    $region33: #{qnetwork_forward.1} parent=1 // pred_fallthru
      _
    // Predicated region
    $region34: #{qnetwork_forward.1} parent=1 // pred_check
      _
    $region35: #{qnetwork_forward.1} parent=1 // pred_check_branch
      %66 = sbr.rel (0) target = $region37
    $region36: #{qnetwork_forward.1} parent=1 // pred_region
      %68 = dma.done [#allocation5], 2048
    $region37: #{qnetwork_forward.1} parent=1 // pred_fallthru
      _
    // Predicated region
    $region38: #{qnetwork_forward.1} parent=1 // pred_check
      _
    $region39: #{qnetwork_forward.1} parent=1 // pred_check_branch
      %70 = sbr.rel (0) target = $region41
    $region40: #{qnetwork_forward.1} parent=1 // pred_region
      %72 = dma.done [#allocation5], 2048
    $region41: #{qnetwork_forward.1} parent=1 // pred_fallthru
      _
    %v73 = vld [vmem:[%s0] sm:$0xff]
    %v74 = vld [vmem:[#allocation2] sm:$0xff]
    %v75 = vld [vmem:[#allocation2 + $0x8] sm:$0xff]
    %v76 = vld [vmem:[#allocation2 + $0x10] sm:$0xff]
    %v77 = vld [vmem:[#allocation2 + $0x18] sm:$0xff]
    %v78 = vld [vmem:[#allocation2 + $0x20] sm:$0xff]
    %v79 = vld [vmem:[#allocation2 + $0x28] sm:$0xff]
    %v80 = vld [vmem:[#allocation2 + $0x30] sm:$0xff]
    %v81 = vld [vmem:[#allocation2 + $0x38] sm:$0xff]
    %v82 = vld [vmem:[#allocation2 + $0x40] sm:$0xff]
    %v83 = vld [vmem:[#allocation2 + $0x48] sm:$0xff]
    %v84 = vld [vmem:[#allocation2 + $0x50] sm:$0xff]
    %v85 = vld [vmem:[#allocation2 + $0x58] sm:$0xff]
    %v86 = vld [vmem:[#allocation2 + $0x60] sm:$0xff]
    %v87 = vld [vmem:[#allocation2 + $0x68] sm:$0xff]
    %v88 = vld [vmem:[#allocation2 + $0x70] sm:$0xff]
    %v89 = vld [vmem:[#allocation2 + $0x78] sm:$0xff]
    %v90 = vld [vmem:[%s2] sm:$0x1]
    %v92 = vperm.slane %v90, 0
    %94 = vmatpush.msra.mxu0 %v89
    %95 = vmatpush.msra.mxu0 %v88
    %96 = vmatpush.msra.mxu0 %v87
    %97 = vmatpush.msra.mxu0 %v86
    %98 = vmatpush.msra.mxu0 %v85
    %99 = vmatpush.msra.mxu0 %v84
    %100 = vmatpush.msra.mxu0 %v83
    %101 = vmatpush.msra.mxu0 %v82
    %102 = vmatpush.msra.mxu0 %v81
    %103 = vmatpush.msra.mxu0 %v80
    %104 = vmatpush.msra.mxu0 %v79
    %105 = vmatpush.msra.mxu0 %v78
    %106 = vmatpush.msra.mxu0 %v77
    %107 = vmatpush.msra.mxu0 %v76
    %108 = vmatpush.msra.mxu0 %v75
    %109 = vmatpush.msra.mxu0 %v74
    %110 = vmatmul.f32.gmra.mxu0 %v73
    %v111 = vpop.f32.mrf.mxu0
    %v112 = vadd.f32 %v92, %v111
    %113 = vdwg.mxu0
    %v114 = vmax.f32 %v112, 0.0
    %v115 = vld [vmem:[#allocation4] sm:$0xff]
    %v116 = vld [vmem:[#allocation4 + $0x8] sm:$0xff]
    %v117 = vld [vmem:[#allocation4 + $0x10] sm:$0xff]
    %v118 = vld [vmem:[#allocation4 + $0x18] sm:$0xff]
    %v119 = vld [vmem:[#allocation4 + $0x20] sm:$0xff]
    %v120 = vld [vmem:[#allocation4 + $0x28] sm:$0xff]
    %v121 = vld [vmem:[#allocation4 + $0x30] sm:$0xff]
    %v122 = vld [vmem:[#allocation4 + $0x38] sm:$0xff]
    %v123 = vld [vmem:[#allocation4 + $0x40] sm:$0xff]
    %v124 = vld [vmem:[#allocation4 + $0x48] sm:$0xff]
    %v125 = vld [vmem:[#allocation4 + $0x50] sm:$0xff]
    %v126 = vld [vmem:[#allocation4 + $0x58] sm:$0xff]
    %v127 = vld [vmem:[#allocation4 + $0x60] sm:$0xff]
    %v128 = vld [vmem:[#allocation4 + $0x68] sm:$0xff]
    %v129 = vld [vmem:[#allocation4 + $0x70] sm:$0xff]
    %v130 = vld [vmem:[#allocation4 + $0x78] sm:$0xff]
    %v131 = vld [vmem:[%s4] sm:$0x1]
    %v133 = vperm.slane %v131, 0
    %135 = vmatpush.msra.mxu0 %v130
    %136 = vmatpush.msra.mxu0 %v129
    %137 = vmatpush.msra.mxu0 %v128
    %138 = vmatpush.msra.mxu0 %v127
    %139 = vmatpush.msra.mxu0 %v126
    %140 = vmatpush.msra.mxu0 %v125
    %141 = vmatpush.msra.mxu0 %v124
    %142 = vmatpush.msra.mxu0 %v123
    %143 = vmatpush.msra.mxu0 %v122
    %144 = vmatpush.msra.mxu0 %v121
    %145 = vmatpush.msra.mxu0 %v120
    %146 = vmatpush.msra.mxu0 %v119
    %147 = vmatpush.msra.mxu0 %v118
    %148 = vmatpush.msra.mxu0 %v117
    %149 = vmatpush.msra.mxu0 %v116
    %150 = vmatpush.msra.mxu0 %v115
    %151 = vmatmul.f32.gmra.mxu0 %v114
    %v152 = vpop.f32.mrf.mxu0
    %v153 = vadd.f32 %v133, %v152
    %154 = vdwg.mxu0
    %v155 = vmax.f32 %v153, 0.0
    %v156 = vld [vmem:[#allocation6] sm:$0xff]
    %v157 = vld [vmem:[#allocation6 + $0x8] sm:$0xff]
    %v158 = vld [vmem:[#allocation6 + $0x10] sm:$0xff]
    %v159 = vld [vmem:[#allocation6 + $0x18] sm:$0xff]
    %v160 = vld [vmem:[#allocation6 + $0x20] sm:$0xff]
    %v161 = vld [vmem:[#allocation6 + $0x28] sm:$0xff]
    %v162 = vld [vmem:[#allocation6 + $0x30] sm:$0xff]
    %v163 = vld [vmem:[#allocation6 + $0x38] sm:$0xff]
    %v164 = vld [vmem:[#allocation6 + $0x40] sm:$0xff]
    %v165 = vld [vmem:[#allocation6 + $0x48] sm:$0xff]
    %v166 = vld [vmem:[#allocation6 + $0x50] sm:$0xff]
    %v167 = vld [vmem:[#allocation6 + $0x58] sm:$0xff]
    %v168 = vld [vmem:[#allocation6 + $0x60] sm:$0xff]
    %v169 = vld [vmem:[#allocation6 + $0x68] sm:$0xff]
    %v170 = vld [vmem:[#allocation6 + $0x70] sm:$0xff]
    %v171 = vld [vmem:[#allocation6 + $0x78] sm:$0xff]
    %v172 = vld [vmem:[%s6] sm:$0x1]
    %v174 = vperm.slane %v172, 0
    %176 = vmatpush.msra.mxu0 %v171
    %177 = vmatpush.msra.mxu0 %v170
    %178 = vmatpush.msra.mxu0 %v169
    %179 = vmatpush.msra.mxu0 %v168
    %180 = vmatpush.msra.mxu0 %v167
    %181 = vmatpush.msra.mxu0 %v166
    %182 = vmatpush.msra.mxu0 %v165
    %183 = vmatpush.msra.mxu0 %v164
    %184 = vmatpush.msra.mxu0 %v163
    %185 = vmatpush.msra.mxu0 %v162
    %186 = vmatpush.msra.mxu0 %v161
    %187 = vmatpush.msra.mxu0 %v160
    %188 = vmatpush.msra.mxu0 %v159
    %189 = vmatpush.msra.mxu0 %v158
    %190 = vmatpush.msra.mxu0 %v157
    %191 = vmatpush.msra.mxu0 %v156
    %192 = vmatmul.f32.gmra.mxu0 %v155
    %v193 = vpop.f32.mrf.mxu0
    %v194 = vadd.f32 %v174, %v193
    %195 = vdwg.mxu0
    %196 = vst [vmem:[%s7] sm:$0xff] %v194
    // Predicated region
    $region42: #{qnetwork_forward.1} parent=1 // pred_check
      _
    $region43: #{qnetwork_forward.1} parent=1 // pred_check_branch
      %198 = sbr.rel (0) target = $region45
    $region44: #{qnetwork_forward.1} parent=1 // pred_region
      _
    $region45: #{qnetwork_forward.1} parent=1 // pred_fallthru
      _
    // Predicated region
    $region46: #{qnetwork_forward.1} parent=1 // pred_check
      _
    $region47: #{qnetwork_forward.1} parent=1 // pred_check_branch
      %200 = sbr.rel (0) target = $region49
    $region48: #{qnetwork_forward.1} parent=1 // pred_region
      _
    $region49: #{qnetwork_forward.1} parent=1 // pred_fallthru
      _
    %201 = vsyncpa [#allocation3], 1
    %202 = vsyncpa [#allocation5], 1

</llo_original>
